<compile_context>
chip_gen: v7x
topology: tpu7x:2x2x1
jax: 0.10.0
libtpu: 0.0.40
codegen_flags: <defaults>
</compile_context>

<pallas_src>
import jax
import jax.numpy as jnp
from jax import lax
from jax.experimental import pallas as pl
from jax.experimental.pallas import tpu as pltpu


def _make_fuse_kernel(T_out, alpha, K, C_f):
    def kernel(x_ref, w_ref, b_ref, o_ref):
        # x_ref: (T_pad, C_f, L_blk)   time-padded fast input, batch folded into lanes
        # w_ref: (C_out, K*C_f)        conv weight with BN scale pre-folded
        # b_ref: (C_out, 1)            folded BN bias
        # o_ref: (T_out, C_out, L_blk) conv + BN + ReLU output
        w = w_ref[...]
        b = b_ref[...]
        L_blk = x_ref.shape[-1]
        # T_out (slow-pathway frame count) is small; a static unrolled loop
        # keeps every slice static and gives the scheduler full visibility.
        for t in range(T_out):
            win = x_ref[pl.ds(t * alpha, K)]            # (K, C_f, L_blk)
            win = win.reshape(K * C_f, L_blk)           # merge taps on sublanes
            y = jnp.dot(w, win, preferred_element_type=jnp.float32)
            o_ref[t] = jnp.maximum(y + b, 0.0).astype(o_ref.dtype)
    return kernel


def _pick_lane_block(L, per_lane_bytes, budget_bytes=6 * 1024 * 1024):
    """Largest lane block that is a multiple of 128, divides L, fits the budget."""
    if L <= 128 or L % 128 != 0:
        return L                       # full extent is always a legal block
    max_lanes = max(128, (budget_bytes // per_lane_bytes) // 128 * 128)
    lb = min(L, max_lanes)
    while L % lb != 0:
        lb -= 128
    return lb


def fuse_fast_to_slow(x_s, x_f, weight, gamma, beta, running_mean, running_var,
                      *, alpha, fusion_kernel, eps=1e-5):
    """x_s: (N, C_s, T_s, H, W); x_f: (N, C_f, T_f, H, W)  (NCTHW like PyTorch).
    weight: (C_out, C_f, K, 1, 1) PyTorch Conv3d weight layout.
    Returns [x_s_fuse, x_f]."""
    N, C_f, T_f, H, W = x_f.shape
    K = fusion_kernel
    pad = K // 2
    C_out = weight.shape[0]
    S = H * W
    L = N * S
    T_pad = T_f + 2 * pad
    T_out = (T_f + 2 * pad - K) // alpha + 1

    # NCTHW -> (T, C, N*S): fold the batch into the lane axis (spatial conv is
    # 1x1, so every (n, h, w) lane is independent) -> lane-dense output stores.
    x_tcl = jnp.transpose(x_f, (2, 1, 0, 3, 4)).reshape(T_f, C_f, L)
    # TODO(synk): temporal zero-padding could move into the kernel via a clamped
    # index_map + per-tap masking; kept in the wrapper for simplicity.
    x_pad = jnp.pad(x_tcl, ((pad, pad), (0, 0), (0, 0)))

    # Fold eval-mode BatchNorm3d into the conv weight (scale) and a bias.
    # TODO(synk): training-mode BN (batch statistics over N,T,H,W) not implemented.
    inv_std = lax.rsqrt(running_var.astype(jnp.float32) + eps)
    scale = gamma.astype(jnp.float32) * inv_std                        # (C_out,)
    bias = (beta.astype(jnp.float32)
            - running_mean.astype(jnp.float32) * scale).reshape(C_out, 1)

    # (C_out, C_f, K, 1, 1) -> (C_out, K, C_f) -> (C_out, K*C_f), BN scale folded.
    w_fold = (jnp.transpose(weight[:, :, :, 0, 0], (0, 2, 1))
              .reshape(C_out, K * C_f) * scale[:, None]).astype(x_f.dtype)

    itemsize = jnp.dtype(x_f.dtype).itemsize
    per_lane_bytes = (T_pad * C_f + T_out * C_out) * itemsize
    L_blk = _pick_lane_block(L, per_lane_bytes)

    fuse_tcl = pl.pallas_call(
        _make_fuse_kernel(T_out, alpha, K, C_f),
        out_shape=jax.ShapeDtypeStruct((T_out, C_out, L), x_f.dtype),
        grid_spec=pltpu.PrefetchScalarGridSpec(
            num_scalar_prefetch=0,
            grid=(L // L_blk,),
            in_specs=[
                pl.BlockSpec((T_pad, C_f, L_blk), lambda l: (0, 0, l)),
                pl.BlockSpec((C_out, K * C_f), lambda l: (0, 0)),
                pl.BlockSpec((C_out, 1), lambda l: (0, 0)),
            ],
            out_specs=pl.BlockSpec((T_out, C_out, L_blk), lambda l: (0, 0, l)),
        ),
        compiler_params=pltpu.CompilerParams(
            dimension_semantics=("parallel",)),
    )(x_pad, w_fold, bias)

    # (T_out, C_out, N*S) -> (N, C_out, T_out, H, W)
    # TODO(synk): layout restore + concat still round-trip HBM; writing directly
    # into a pre-allocated channel slice of the concat buffer is left out.
    fuse_ncthw = jnp.transpose(
        fuse_tcl.reshape(T_out, C_out, N, H, W), (2, 1, 0, 3, 4))
    x_s_fuse = jnp.concatenate([x_s, fuse_ncthw], axis=1)
    return [x_s_fuse, x_f]


def _reference(x_s, x_f, weight, gamma, beta, running_mean, running_var,
               *, alpha, fusion_kernel, eps=1e-5):
    """Pure-JAX reference (same math, no Pallas)."""
    N, C_f, T_f, H, W = x_f.shape
    K = fusion_kernel
    pad = K // 2
    C_out = weight.shape[0]
    S = H * W
    T_out = (T_f + 2 * pad - K) // alpha + 1

    x_ntcs = jnp.transpose(x_f.reshape(N, C_f, T_f, S), (0, 2, 1, 3))
    x_pad = jnp.pad(x_ntcs, ((0, 0), (pad, pad), (0, 0), (0, 0)))
    w_k = jnp.transpose(weight[:, :, :, 0, 0], (2, 0, 1))  # (K, C_out, C_f)

    windows = jnp.stack(
        [x_pad[:, k:k + alpha * (T_out - 1) + 1:alpha] for k in range(K)], axis=0
    )  # (K, N, T_out, C_f, S)
    conv = jnp.einsum("koc,kntcs->ntos", w_k, windows)  # (N, T_out, C_out, S)

    inv_std = 1.0 / jnp.sqrt(running_var + eps)
    scale = (gamma * inv_std).reshape(1, 1, C_out, 1)
    bias = (beta - running_mean * gamma * inv_std).reshape(1, 1, C_out, 1)
    fuse = jnp.maximum(conv * scale + bias, 0.0)

    fuse_ncthw = jnp.transpose(fuse, (0, 2, 1, 3)).reshape(N, C_out, T_out, H, W)
    return [jnp.concatenate([x_s, fuse_ncthw], axis=1), x_f]


if __name__ == "__main__":
    # Small SlowFast-like shapes.
    N = 2
    dim_in = 8                      # fast-pathway channels (conv input)
    fusion_conv_channel_ratio = 2
    fusion_kernel = 5
    alpha = 4
    C_slow = 32
    T_slow = 4
    T_fast = T_slow * alpha
    H = W = 8
    C_out = dim_in * fusion_conv_channel_ratio

    key = jax.random.PRNGKey(0)
    k1, k2, k3, k4, k5, k6, k7 = jax.random.split(key, 7)

    x_s = jax.random.normal(k1, (N, C_slow, T_slow, H, W), jnp.float32)
    x_f = jax.random.normal(k2, (N, dim_in, T_fast, H, W), jnp.float32)

    # Conv3d weight (C_out, C_in, K, 1, 1), no bias — deterministic init.
    weight = 0.1 * jax.random.normal(
        k3, (C_out, dim_in, fusion_kernel, 1, 1), jnp.float32)

    # BatchNorm3d parameters / running stats (deterministic, non-trivial values
    # so the folded affine path is actually exercised).
    gamma = 1.0 + 0.1 * jax.random.normal(k4, (C_out,), jnp.float32)
    beta = 0.1 * jax.random.normal(k5, (C_out,), jnp.float32)
    running_mean = 0.05 * jax.random.normal(k6, (C_out,), jnp.float32)
    running_var = 1.0 + 0.1 * jax.nn.softplus(
        jax.random.normal(k7, (C_out,), jnp.float32))

    out = fuse_fast_to_slow(
        x_s, x_f, weight, gamma, beta, running_mean, running_var,
        alpha=alpha, fusion_kernel=fusion_kernel)
    out = jax.block_until_ready(out)

    ref = _reference(
        x_s, x_f, weight, gamma, beta, running_mean, running_var,
        alpha=alpha, fusion_kernel=fusion_kernel)

    assert out[0].shape == (N, C_slow + C_out, T_slow, H, W), out[0].shape
    assert out[1].shape == x_f.shape
    assert jnp.allclose(out[0], ref[0], atol=1e-4, rtol=1e-4)
    assert jnp.allclose(out[1], ref[1])

    print("KERNEL_OK")
</pallas_src>

<mosaic_0001>
module attributes {stable_mosaic.version = 11 : i64} {
  func.func @kernel(%arg0: i32, %arg1: memref<20x8x128xf32, #tpu.memory_space<vmem>>, %arg2: memref<16x40xf32, #tpu.memory_space<vmem>>, %arg3: memref<16x1xf32, #tpu.memory_space<vmem>>, %arg4: memref<4x16x128xf32, #tpu.memory_space<vmem>>) attributes {dimension_semantics = [#tpu.dimension_semantics<parallel>], iteration_bounds = array<i64: 1>, scalar_prefetch = 0 : i64, scratch_operands = 0 : i64, tpu.core_type = #tpu.core_type<tc>, window_params = [{transform_indices = @transform_0, window_bounds = array<i64: 20, 8, 128>}, {pipeline_mode = #tpu.pipeline_mode<synchronous>, transform_indices = @transform_1, window_bounds = array<i64: 16, 40>}, {pipeline_mode = #tpu.pipeline_mode<synchronous>, transform_indices = @transform_2, window_bounds = array<i64: 16, 1>}, {transform_indices = @transform_3, window_bounds = array<i64: 4, 16, 128>}]} {
    %c0 = arith.constant 0 : index
    %c0_0 = arith.constant 0 : index
    %0 = vector.load %arg2[%c0, %c0_0] : memref<16x40xf32, #tpu.memory_space<vmem>>, vector<16x40xf32>
    %c0_1 = arith.constant 0 : index
    %c0_2 = arith.constant 0 : index
    %1 = vector.load %arg3[%c0_1, %c0_2] : memref<16x1xf32, #tpu.memory_space<vmem>>, vector<16x1xf32>
    %c0_3 = arith.constant 0 : index
    %c0_4 = arith.constant 0 : index
    %c0_5 = arith.constant 0 : index
    %2 = vector.load %arg1[%c0_3, %c0_4, %c0_5] : memref<20x8x128xf32, #tpu.memory_space<vmem>>, vector<5x8x128xf32>
    %3 = vector.shape_cast %2 : vector<5x8x128xf32> to vector<40x128xf32>
    %cst = arith.constant dense<0.000000e+00> : vector<16x128xf32>
    %4 = tpu.matmul %0, %3, %cst {dimension_numbers = #tpu.dot_dimension_numbers<[1], [0], [0], [1], [0, 0, 1, 1], [], []>} : vector<16x40xf32>, vector<40x128xf32>, vector<16x128xf32> -> vector<16x128xf32>
    %5 = vector.broadcast %1 : vector<16x1xf32> to vector<16x128xf32>
    %6 = arith.addf %4, %5 : vector<16x128xf32>
    %cst_6 = arith.constant 0.000000e+00 : f32
    %7 = vector.broadcast %cst_6 : f32 to vector<16x128xf32>
    %8 = arith.maximumf %6, %7 : vector<16x128xf32>
    %c0_7 = arith.constant 0 : index
    %c0_8 = arith.constant 0 : index
    %c0_9 = arith.constant 0 : index
    %9 = vector.load %arg4[%c0_7, %c0_8, %c0_9] : memref<4x16x128xf32, #tpu.memory_space<vmem>>, vector<1x16x128xf32>
    %10 = vector.shape_cast %9 : vector<1x16x128xf32> to vector<16x128xf32>
    %11 = vector.shape_cast %8 : vector<16x128xf32> to vector<1x16x128xf32>
    tpu.vector_store %arg4[%c0_7, %c0_8, %c0_9], %11 {strides = array<i32>} : memref<4x16x128xf32, #tpu.memory_space<vmem>>, vector<1x16x128xf32>,
    %c4 = arith.constant 4 : index
    %c0_10 = arith.constant 0 : index
    %c0_11 = arith.constant 0 : index
    %12 = vector.load %arg1[%c4, %c0_10, %c0_11] : memref<20x8x128xf32, #tpu.memory_space<vmem>>, vector<5x8x128xf32>
    %13 = vector.shape_cast %12 : vector<5x8x128xf32> to vector<40x128xf32>
    %cst_12 = arith.constant dense<0.000000e+00> : vector<16x128xf32>
    %14 = tpu.matmul %0, %13, %cst_12 {dimension_numbers = #tpu.dot_dimension_numbers<[1], [0], [0], [1], [0, 0, 1, 1], [], []>} : vector<16x40xf32>, vector<40x128xf32>, vector<16x128xf32> -> vector<16x128xf32>
    %15 = vector.broadcast %1 : vector<16x1xf32> to vector<16x128xf32>
    %16 = arith.addf %14, %15 : vector<16x128xf32>
    %cst_13 = arith.constant 0.000000e+00 : f32
    %17 = vector.broadcast %cst_13 : f32 to vector<16x128xf32>
    %18 = arith.maximumf %16, %17 : vector<16x128xf32>
    %c1 = arith.constant 1 : index
    %c0_14 = arith.constant 0 : index
    %c0_15 = arith.constant 0 : index
    %19 = vector.load %arg4[%c1, %c0_14, %c0_15] : memref<4x16x128xf32, #tpu.memory_space<vmem>>, vector<1x16x128xf32>
    %20 = vector.shape_cast %19 : vector<1x16x128xf32> to vector<16x128xf32>
    %21 = vector.shape_cast %18 : vector<16x128xf32> to vector<1x16x128xf32>
    tpu.vector_store %arg4[%c1, %c0_14, %c0_15], %21 {strides = array<i32>} : memref<4x16x128xf32, #tpu.memory_space<vmem>>, vector<1x16x128xf32>,
    %c8 = arith.constant 8 : index
    %c0_16 = arith.constant 0 : index
    %c0_17 = arith.constant 0 : index
    %22 = vector.load %arg1[%c8, %c0_16, %c0_17] : memref<20x8x128xf32, #tpu.memory_space<vmem>>, vector<5x8x128xf32>
    %23 = vector.shape_cast %22 : vector<5x8x128xf32> to vector<40x128xf32>
    %cst_18 = arith.constant dense<0.000000e+00> : vector<16x128xf32>
    %24 = tpu.matmul %0, %23, %cst_18 {dimension_numbers = #tpu.dot_dimension_numbers<[1], [0], [0], [1], [0, 0, 1, 1], [], []>} : vector<16x40xf32>, vector<40x128xf32>, vector<16x128xf32> -> vector<16x128xf32>
    %25 = vector.broadcast %1 : vector<16x1xf32> to vector<16x128xf32>
    %26 = arith.addf %24, %25 : vector<16x128xf32>
    %cst_19 = arith.constant 0.000000e+00 : f32
    %27 = vector.broadcast %cst_19 : f32 to vector<16x128xf32>
    %28 = arith.maximumf %26, %27 : vector<16x128xf32>
    %c2 = arith.constant 2 : index
    %c0_20 = arith.constant 0 : index
    %c0_21 = arith.constant 0 : index
    %29 = vector.load %arg4[%c2, %c0_20, %c0_21] : memref<4x16x128xf32, #tpu.memory_space<vmem>>, vector<1x16x128xf32>
    %30 = vector.shape_cast %29 : vector<1x16x128xf32> to vector<16x128xf32>
    %31 = vector.shape_cast %28 : vector<16x128xf32> to vector<1x16x128xf32>
    tpu.vector_store %arg4[%c2, %c0_20, %c0_21], %31 {strides = array<i32>} : memref<4x16x128xf32, #tpu.memory_space<vmem>>, vector<1x16x128xf32>,
    %c12 = arith.constant 12 : index
    %c0_22 = arith.constant 0 : index
    %c0_23 = arith.constant 0 : index
    %32 = vector.load %arg1[%c12, %c0_22, %c0_23] : memref<20x8x128xf32, #tpu.memory_space<vmem>>, vector<5x8x128xf32>
    %33 = vector.shape_cast %32 : vector<5x8x128xf32> to vector<40x128xf32>
    %cst_24 = arith.constant dense<0.000000e+00> : vector<16x128xf32>
    %34 = tpu.matmul %0, %33, %cst_24 {dimension_numbers = #tpu.dot_dimension_numbers<[1], [0], [0], [1], [0, 0, 1, 1], [], []>} : vector<16x40xf32>, vector<40x128xf32>, vector<16x128xf32> -> vector<16x128xf32>
    %35 = vector.broadcast %1 : vector<16x1xf32> to vector<16x128xf32>
    %36 = arith.addf %34, %35 : vector<16x128xf32>
    %cst_25 = arith.constant 0.000000e+00 : f32
    %37 = vector.broadcast %cst_25 : f32 to vector<16x128xf32>
    %38 = arith.maximumf %36, %37 : vector<16x128xf32>
    %c3 = arith.constant 3 : index
    %c0_26 = arith.constant 0 : index
    %c0_27 = arith.constant 0 : index
    %39 = vector.load %arg4[%c3, %c0_26, %c0_27] : memref<4x16x128xf32, #tpu.memory_space<vmem>>, vector<1x16x128xf32>
    %40 = vector.shape_cast %39 : vector<1x16x128xf32> to vector<16x128xf32>
    %41 = vector.shape_cast %38 : vector<16x128xf32> to vector<1x16x128xf32>
    tpu.vector_store %arg4[%c3, %c0_26, %c0_27], %41 {strides = array<i32>} : memref<4x16x128xf32, #tpu.memory_space<vmem>>, vector<1x16x128xf32>,
    return
  }
  func.func @transform_0(%arg0: i32) -> (i32, i32, i32) {
    %c0_i32 = arith.constant 0 : i32
    %c0_i32_0 = arith.constant 0 : i32
    %c0_i32_1 = arith.constant 0 : i32
    return %c0_i32, %c0_i32_0, %arg0 : i32, i32, i32
  }
  func.func @transform_1(%arg0: i32) -> (i32, i32) {
    %c0_i32 = arith.constant 0 : i32
    %c0_i32_0 = arith.constant 0 : i32
    %c0_i32_1 = arith.constant 0 : i32
    return %c0_i32, %c0_i32_0 : i32, i32
  }
  func.func @transform_2(%arg0: i32) -> (i32, i32) {
    %c0_i32 = arith.constant 0 : i32
    %c0_i32_0 = arith.constant 0 : i32
    %c0_i32_1 = arith.constant 0 : i32
    return %c0_i32, %c0_i32_0 : i32, i32
  }
  func.func @transform_3(%arg0: i32) -> (i32, i32, i32) {
    %c0_i32 = arith.constant 0 : i32
    %c0_i32_0 = arith.constant 0 : i32
    %c0_i32_1 = arith.constant 0 : i32
    return %c0_i32, %c0_i32_0, %arg0 : i32, i32, i32
  }
}

</mosaic_0001>

<llo_original>
// kernel: tpu_custom_call.1
$region0: #{tpu_custom_call.1}
  #allocation0 [shape = 'u32[]', space=smem, size = 0x4, offset = 0x4, fixed_abs, tag = 'smem constant byte address 0x4 - core index']
  #allocation1 [shape = 'u32[144,128]{1,0:T(1,128)}', space=vmem, size = 0x12000, scoped, tag = 'internal scratch']
  %s0 = inlined_call_operand.hbm [shape: f32[20,8,128], index: 0, kind: input, shape index: {}]
  %s1 = inlined_call_operand.vmem [shape: f32[16,40], index: 1, kind: input, shape index: {}]
  %s2 = inlined_call_operand.vmem [shape: f32[16,1], index: 2, kind: input, shape index: {}]
  %s3 = inlined_call_operand.hbm [shape: f32[4,16,128], index: 3, kind: output, shape index: {}]
  %s4 = sld [smem:[#allocation0]]
  $region26: #{tpu_custom_call.1} parent=0
    _
  %s6 = ssub.s32 1, %s4
  %s7 = scalar_select 0, %s6, %s4
  $region1: #{tpu_custom_call.1} parent=0
    #allocation2 [shape = 'u8[81920]{0}', space=vmem, size = 0x14000, scoped, tag = 'input window, operand 0, single buffered']
    #allocation3 [shape = 's32[1]{0}', space=sflag, size = 0x4, scoped, tag = 'scoped memory for tpu_custom_call.1']
    #allocation4 [shape = 's32[1]{0}', space=sflag, size = 0x4, scoped, tag = 'scoped memory for tpu_custom_call.1']
    #allocation5 [shape = 'u8[32768]{0}', space=vmem, size = 0x8000, scoped, tag = 'output window, operand 0, single buffered']
    %8 = vsyncpa [#allocation3], 0
    %9 = vsyncpa [#allocation4], 0
    // Predicated region
    $region2: #{tpu_custom_call.1} parent=1 // pred_check
      _
    $region3: #{tpu_custom_call.1} parent=1 // pred_check_branch
      %11 = sbr.rel (0) target = $region5
    $region4: #{tpu_custom_call.1} parent=1 // pred_region
      %s13 = ssub.s32 2560, 2560
      %14 = vsyncadd [#allocation3], %s13
      %s15 = sshll.u32 [#allocation2], 4
      %s16 = int_to_ptr.vmem [resolvable:$true] %s15
      %21 = dma.hbm_to_vmem [thread:$0]  %s0, 2560, %s16, [#allocation3], 128, 128, 8
    $region5: #{tpu_custom_call.1} parent=1 // pred_fallthru
      _
    // Predicated region
    $region6: #{tpu_custom_call.1} parent=1 // pred_check
      _
    $region7: #{tpu_custom_call.1} parent=1 // pred_check_branch
      %23 = sbr.rel (0) target = $region9
    $region8: #{tpu_custom_call.1} parent=1 // pred_region
      _
    $region9: #{tpu_custom_call.1} parent=1 // pred_fallthru
      _
    // Predicated region
    $region10: #{tpu_custom_call.1} parent=1 // pred_check
      _
    $region11: #{tpu_custom_call.1} parent=1 // pred_check_branch
      %25 = sbr.rel (0) target = $region13
    $region12: #{tpu_custom_call.1} parent=1 // pred_region
      _
    $region13: #{tpu_custom_call.1} parent=1 // pred_fallthru
      _
    // Predicated region
    $region14: #{tpu_custom_call.1} parent=1 // pred_check
      _
    $region15: #{tpu_custom_call.1} parent=1 // pred_check_branch
      %27 = sbr.rel (0) target = $region17
    $region16: #{tpu_custom_call.1} parent=1 // pred_region
      %28 = dma.done [#allocation3], 2560
    $region17: #{tpu_custom_call.1} parent=1 // pred_fallthru
      _
    %v29 = vld [vmem:[%s1] sm:$0xff]
    %v30 = vld [vmem:[%s1 + $0x8] sm:$0xff]
    %v31 = vld [vmem:[%s2] sm:$0xff]
    %v32 = vld [vmem:[%s2 + $0x8] sm:$0xff]
    %v33 = vld [vmem:[#allocation2] sm:$0xff]
    %v34 = vld [vmem:[#allocation2 + $0x8] sm:$0xff]
    %v35 = vld [vmem:[#allocation2 + $0x10] sm:$0xff]
    %v36 = vld [vmem:[#allocation2 + $0x18] sm:$0xff]
    %v37 = vld [vmem:[#allocation2 + $0x20] sm:$0xff]
    %39 = vset.pattern.permute.xlu0 0
    %40 = vperm.xlu0 %39, %v31
    %v41 = vpop.permute.xlu0 %40
    %44 = vset.pattern.permute.xlu0 0
    %45 = vperm.xlu0 %44, %v32
    %v46 = vpop.permute.xlu0 %45
    %vm48 = vcmask 326656
    %v50 = vsel %vm48, %v29, 0
    %v53 = vsel %vm48, %v30, 0
    %55 = vmatprep.subr.mxu0 0.0
    %56 = vmatpush1.msra.mxu0 %v33
    %57 = vmatprep.subr.mxu0 0.0
    %58 = vmatpush1.msra.mxu0 %v34
    %59 = vmatprep.subr.mxu0 0.0
    %60 = vmatpush1.msra.mxu0 %v35
    %61 = vmatprep.subr.mxu0 0.0
    %62 = vmatpush1.msra.mxu0 %v36
    %63 = vmatprep.subr.mxu0 0.0
    %64 = vmatpush1.msra.mxu0 %v37
    %65 = vmatprep.subr.mxu0 0.0
    %66 = vmatpush1.msra.mxu0 0.0
    %67 = vmatprep.subr.mxu0 0.0
    %68 = vmatpush1.msra.mxu0 0.0
    %69 = vmatprep.subr.mxu0 0.0
    %70 = vmatpush1.msra.mxu0 0.0
    %71 = vmatprep.subr.mxu0 0.0
    %72 = vmatpush1.msra.mxu0 0.0
    %73 = vmatprep.subr.mxu0 0.0
    %74 = vmatpush1.msra.mxu0 0.0
    %75 = vmatprep.subr.mxu0 0.0
    %76 = vmatpush1.msra.mxu0 0.0
    %77 = vmatprep.subr.mxu0 0.0
    %78 = vmatpush1.msra.mxu0 0.0
    %79 = vmatprep.subr.mxu0 0.0
    %80 = vmatpush1.msra.mxu0 0.0
    %81 = vmatprep.subr.mxu0 0.0
    %82 = vmatpush1.msra.mxu0 0.0
    %83 = vmatprep.subr.mxu0 0.0
    %84 = vmatpush1.msra.mxu0 0.0
    %85 = vmatprep.subr.mxu0 0.0
    %86 = vmatpush1.msra.mxu0 0.0
    %87 = vmatprep.subr.mxu0 0.0
    %88 = vmatpush1.msra.mxu0 0.0
    %89 = vmatprep.subr.mxu0 0.0
    %90 = vmatpush1.msra.mxu0 0.0
    %91 = vmatprep.subr.mxu0 0.0
    %92 = vmatpush1.msra.mxu0 0.0
    %93 = vmatprep.subr.mxu0 0.0
    %94 = vmatpush1.msra.mxu0 0.0
    %95 = vmatprep.subr.mxu0 0.0
    %96 = vmatpush1.msra.mxu0 0.0
    %97 = vmatprep.subr.mxu0 0.0
    %98 = vmatpush1.msra.mxu0 0.0
    %99 = vmatprep.subr.mxu0 0.0
    %100 = vmatpush1.msra.mxu0 0.0
    %101 = vmatprep.subr.mxu0 0.0
    %102 = vmatpush1.msra.mxu0 0.0
    %103 = vmatprep.subr.mxu0 0.0
    %104 = vmatpush1.msra.mxu0 0.0
    %105 = vmatprep.subr.mxu0 0.0
    %106 = vmatpush1.msra.mxu0 0.0
    %107 = vmatprep.subr.mxu0 0.0
    %108 = vmatpush1.msra.mxu0 0.0
    %109 = vmatprep.subr.mxu0 0.0
    %110 = vmatpush1.msra.mxu0 0.0
    %111 = vmatprep.subr.mxu0 0.0
    %112 = vmatpush1.msra.mxu0 0.0
    %113 = vmatprep.subr.mxu0 0.0
    %114 = vmatpush1.msra.mxu0 0.0
    %115 = vmatprep.subr.mxu0 0.0
    %116 = vmatpush1.msra.mxu0 0.0
    %117 = vmatprep.subr.mxu0 0.0
    %118 = vmatpush1.msra.mxu0 0.0
    %119 = vmatprep.mubr.f32.mxu0 0.0
    %120 = vmatmul.mubr.f32.gmra.mrb[0].mxu0 %v50
    %v121 = vpop.f32.mrb[0].mxu0
    %v122 = vadd.f32 %v41, %v121
    %v123 = vpop.f32.mrb[0].mxu0
    %124 = vmatprep.mubr.f32.mxu0 0.0
    %125 = vmatmul.mubr.f32.gmra.mrb[0].mxu0 %v53
    %v126 = vpop.f32.mrb[0].mxu0
    %v127 = vadd.f32 %v46, %v126
    %v128 = vpop.f32.mrb[0].mxu0
    %129 = vdwg.mxu0
    %v130 = vmax.f32 %v122, 0.0
    %v131 = vmax.f32 %v127, 0.0
    %132 = vst [vmem:[#allocation5] sm:$0xff] %v130
    %133 = vst [vmem:[#allocation5 + $0x8] sm:$0xff] %v131
    %s134 = scalar_lea.vmem [#allocation2], 32
    %v135 = vld [vmem:[%s134] sm:$0xff]
    %v136 = vld [vmem:[%s134 + $0x8] sm:$0xff]
    %v137 = vld [vmem:[%s134 + $0x10] sm:$0xff]
    %v138 = vld [vmem:[%s134 + $0x18] sm:$0xff]
    %v139 = vld [vmem:[%s134 + $0x20] sm:$0xff]
    %140 = vmatprep.subr.mxu0 0.0
    %141 = vmatpush1.msra.mxu0 %v135
    %142 = vmatprep.subr.mxu0 0.0
    %143 = vmatpush1.msra.mxu0 %v136
    %144 = vmatprep.subr.mxu0 0.0
    %145 = vmatpush1.msra.mxu0 %v137
    %146 = vmatprep.subr.mxu0 0.0
    %147 = vmatpush1.msra.mxu0 %v138
    %148 = vmatprep.subr.mxu0 0.0
    %149 = vmatpush1.msra.mxu0 %v139
    %150 = vmatprep.subr.mxu0 0.0
    %151 = vmatpush1.msra.mxu0 0.0
    %152 = vmatprep.subr.mxu0 0.0
    %153 = vmatpush1.msra.mxu0 0.0
    %154 = vmatprep.subr.mxu0 0.0
    %155 = vmatpush1.msra.mxu0 0.0
    %156 = vmatprep.subr.mxu0 0.0
    %157 = vmatpush1.msra.mxu0 0.0
    %158 = vmatprep.subr.mxu0 0.0
    %159 = vmatpush1.msra.mxu0 0.0
    %160 = vmatprep.subr.mxu0 0.0
    %161 = vmatpush1.msra.mxu0 0.0
    %162 = vmatprep.subr.mxu0 0.0
    %163 = vmatpush1.msra.mxu0 0.0
    %164 = vmatprep.subr.mxu0 0.0
    %165 = vmatpush1.msra.mxu0 0.0
    %166 = vmatprep.subr.mxu0 0.0
    %167 = vmatpush1.msra.mxu0 0.0
    %168 = vmatprep.subr.mxu0 0.0
    %169 = vmatpush1.msra.mxu0 0.0
    %170 = vmatprep.subr.mxu0 0.0
    %171 = vmatpush1.msra.mxu0 0.0
    %172 = vmatprep.subr.mxu0 0.0
    %173 = vmatpush1.msra.mxu0 0.0
    %174 = vmatprep.subr.mxu0 0.0
    %175 = vmatpush1.msra.mxu0 0.0
    %176 = vmatprep.subr.mxu0 0.0
    %177 = vmatpush1.msra.mxu0 0.0
    %178 = vmatprep.subr.mxu0 0.0
    %179 = vmatpush1.msra.mxu0 0.0
    %180 = vmatprep.subr.mxu0 0.0
    %181 = vmatpush1.msra.mxu0 0.0
    %182 = vmatprep.subr.mxu0 0.0
    %183 = vmatpush1.msra.mxu0 0.0
    %184 = vmatprep.subr.mxu0 0.0
    %185 = vmatpush1.msra.mxu0 0.0
    %186 = vmatprep.subr.mxu0 0.0
    %187 = vmatpush1.msra.mxu0 0.0
    %188 = vmatprep.subr.mxu0 0.0
    %189 = vmatpush1.msra.mxu0 0.0
    %190 = vmatprep.subr.mxu0 0.0
    %191 = vmatpush1.msra.mxu0 0.0
    %192 = vmatprep.subr.mxu0 0.0
    %193 = vmatpush1.msra.mxu0 0.0
    %194 = vmatprep.subr.mxu0 0.0
    %195 = vmatpush1.msra.mxu0 0.0
    %196 = vmatprep.subr.mxu0 0.0
    %197 = vmatpush1.msra.mxu0 0.0
    %198 = vmatprep.subr.mxu0 0.0
    %199 = vmatpush1.msra.mxu0 0.0
    %200 = vmatprep.subr.mxu0 0.0
    %201 = vmatpush1.msra.mxu0 0.0
    %202 = vmatprep.subr.mxu0 0.0
    %203 = vmatpush1.msra.mxu0 0.0
    %204 = vmatprep.mubr.f32.mxu0 0.0
    %205 = vmatmul.mubr.f32.gmra.mrb[0].mxu0 %v50
    %v206 = vpop.f32.mrb[0].mxu0
    %v207 = vadd.f32 %v41, %v206
    %v208 = vpop.f32.mrb[0].mxu0
    %209 = vmatprep.mubr.f32.mxu0 0.0
    %210 = vmatmul.mubr.f32.gmra.mrb[0].mxu0 %v53
    %v211 = vpop.f32.mrb[0].mxu0
    %v212 = vadd.f32 %v46, %v211
    %v213 = vpop.f32.mrb[0].mxu0
    %214 = vdwg.mxu0
    %v215 = vmax.f32 %v207, 0.0
    %v216 = vmax.f32 %v212, 0.0
    %s217 = scalar_lea.vmem [#allocation5], 16
    %218 = vst [vmem:[%s217] sm:$0xff] %v215
    %219 = vst [vmem:[%s217 + $0x8] sm:$0xff] %v216
    %s220 = scalar_lea.vmem [#allocation2], 64
    %v221 = vld [vmem:[%s220] sm:$0xff]
    %v222 = vld [vmem:[%s220 + $0x8] sm:$0xff]
    %v223 = vld [vmem:[%s220 + $0x10] sm:$0xff]
    %v224 = vld [vmem:[%s220 + $0x18] sm:$0xff]
    %v225 = vld [vmem:[%s220 + $0x20] sm:$0xff]
    %226 = vmatprep.subr.mxu0 0.0
    %227 = vmatpush1.msra.mxu0 %v221
    %228 = vmatprep.subr.mxu0 0.0
    %229 = vmatpush1.msra.mxu0 %v222
    %230 = vmatprep.subr.mxu0 0.0
    %231 = vmatpush1.msra.mxu0 %v223
    %232 = vmatprep.subr.mxu0 0.0
    %233 = vmatpush1.msra.mxu0 %v224
    %234 = vmatprep.subr.mxu0 0.0
    %235 = vmatpush1.msra.mxu0 %v225
    %236 = vmatprep.subr.mxu0 0.0
    %237 = vmatpush1.msra.mxu0 0.0
    %238 = vmatprep.subr.mxu0 0.0
    %239 = vmatpush1.msra.mxu0 0.0
    %240 = vmatprep.subr.mxu0 0.0
    %241 = vmatpush1.msra.mxu0 0.0
    %242 = vmatprep.subr.mxu0 0.0
    %243 = vmatpush1.msra.mxu0 0.0
    %244 = vmatprep.subr.mxu0 0.0
    %245 = vmatpush1.msra.mxu0 0.0
    %246 = vmatprep.subr.mxu0 0.0
    %247 = vmatpush1.msra.mxu0 0.0
    %248 = vmatprep.subr.mxu0 0.0
    %249 = vmatpush1.msra.mxu0 0.0
    %250 = vmatprep.subr.mxu0 0.0
    %251 = vmatpush1.msra.mxu0 0.0
    %252 = vmatprep.subr.mxu0 0.0
    %253 = vmatpush1.msra.mxu0 0.0
    %254 = vmatprep.subr.mxu0 0.0
    %255 = vmatpush1.msra.mxu0 0.0
    %256 = vmatprep.subr.mxu0 0.0
    %257 = vmatpush1.msra.mxu0 0.0
    %258 = vmatprep.subr.mxu0 0.0
    %259 = vmatpush1.msra.mxu0 0.0
    %260 = vmatprep.subr.mxu0 0.0
    %261 = vmatpush1.msra.mxu0 0.0
    %262 = vmatprep.subr.mxu0 0.0
    %263 = vmatpush1.msra.mxu0 0.0
    %264 = vmatprep.subr.mxu0 0.0
    %265 = vmatpush1.msra.mxu0 0.0
    %266 = vmatprep.subr.mxu0 0.0
    %267 = vmatpush1.msra.mxu0 0.0
    %268 = vmatprep.subr.mxu0 0.0
    %269 = vmatpush1.msra.mxu0 0.0
    %270 = vmatprep.subr.mxu0 0.0
    %271 = vmatpush1.msra.mxu0 0.0
    %272 = vmatprep.subr.mxu0 0.0
    %273 = vmatpush1.msra.mxu0 0.0
    %274 = vmatprep.subr.mxu0 0.0
    %275 = vmatpush1.msra.mxu0 0.0
    %276 = vmatprep.subr.mxu0 0.0
    %277 = vmatpush1.msra.mxu0 0.0
    %278 = vmatprep.subr.mxu0 0.0
    %279 = vmatpush1.msra.mxu0 0.0
    %280 = vmatprep.subr.mxu0 0.0
    %281 = vmatpush1.msra.mxu0 0.0
    %282 = vmatprep.subr.mxu0 0.0
    %283 = vmatpush1.msra.mxu0 0.0
    %284 = vmatprep.subr.mxu0 0.0
    %285 = vmatpush1.msra.mxu0 0.0
    %286 = vmatprep.subr.mxu0 0.0
    %287 = vmatpush1.msra.mxu0 0.0
    %288 = vmatprep.subr.mxu0 0.0
    %289 = vmatpush1.msra.mxu0 0.0
    %290 = vmatprep.mubr.f32.mxu0 0.0
    %291 = vmatmul.mubr.f32.gmra.mrb[0].mxu0 %v50
    %v292 = vpop.f32.mrb[0].mxu0
    %v293 = vadd.f32 %v41, %v292
    %v294 = vpop.f32.mrb[0].mxu0
    %295 = vmatprep.mubr.f32.mxu0 0.0
    %296 = vmatmul.mubr.f32.gmra.mrb[0].mxu0 %v53
    %v297 = vpop.f32.mrb[0].mxu0
    %v298 = vadd.f32 %v46, %v297
    %v299 = vpop.f32.mrb[0].mxu0
    %300 = vdwg.mxu0
    %v301 = vmax.f32 %v293, 0.0
    %v302 = vmax.f32 %v298, 0.0
    %s303 = scalar_lea.vmem [#allocation5], 32
    %304 = vst [vmem:[%s303] sm:$0xff] %v301
    %305 = vst [vmem:[%s303 + $0x8] sm:$0xff] %v302
    %s306 = scalar_lea.vmem [#allocation2], 96
    %v307 = vld [vmem:[%s306] sm:$0xff]
    %v308 = vld [vmem:[%s306 + $0x8] sm:$0xff]
    %v309 = vld [vmem:[%s306 + $0x10] sm:$0xff]
    %v310 = vld [vmem:[%s306 + $0x18] sm:$0xff]
    %v311 = vld [vmem:[%s306 + $0x20] sm:$0xff]
    %312 = vmatprep.subr.mxu0 0.0
    %313 = vmatpush1.msra.mxu0 %v307
    %314 = vmatprep.subr.mxu0 0.0
    %315 = vmatpush1.msra.mxu0 %v308
    %316 = vmatprep.subr.mxu0 0.0
    %317 = vmatpush1.msra.mxu0 %v309
    %318 = vmatprep.subr.mxu0 0.0
    %319 = vmatpush1.msra.mxu0 %v310
    %320 = vmatprep.subr.mxu0 0.0
    %321 = vmatpush1.msra.mxu0 %v311
    %322 = vmatprep.subr.mxu0 0.0
    %323 = vmatpush1.msra.mxu0 0.0
    %324 = vmatprep.subr.mxu0 0.0
    %325 = vmatpush1.msra.mxu0 0.0
    %326 = vmatprep.subr.mxu0 0.0
    %327 = vmatpush1.msra.mxu0 0.0
    %328 = vmatprep.subr.mxu0 0.0
    %329 = vmatpush1.msra.mxu0 0.0
    %330 = vmatprep.subr.mxu0 0.0
    %331 = vmatpush1.msra.mxu0 0.0
    %332 = vmatprep.subr.mxu0 0.0
    %333 = vmatpush1.msra.mxu0 0.0
    %334 = vmatprep.subr.mxu0 0.0
    %335 = vmatpush1.msra.mxu0 0.0
    %336 = vmatprep.subr.mxu0 0.0
    %337 = vmatpush1.msra.mxu0 0.0
    %338 = vmatprep.subr.mxu0 0.0
    %339 = vmatpush1.msra.mxu0 0.0
    %340 = vmatprep.subr.mxu0 0.0
    %341 = vmatpush1.msra.mxu0 0.0
    %342 = vmatprep.subr.mxu0 0.0
    %343 = vmatpush1.msra.mxu0 0.0
    %344 = vmatprep.subr.mxu0 0.0
    %345 = vmatpush1.msra.mxu0 0.0
    %346 = vmatprep.subr.mxu0 0.0
    %347 = vmatpush1.msra.mxu0 0.0
    %348 = vmatprep.subr.mxu0 0.0
    %349 = vmatpush1.msra.mxu0 0.0
    %350 = vmatprep.subr.mxu0 0.0
    %351 = vmatpush1.msra.mxu0 0.0
    %352 = vmatprep.subr.mxu0 0.0
    %353 = vmatpush1.msra.mxu0 0.0
    %354 = vmatprep.subr.mxu0 0.0
    %355 = vmatpush1.msra.mxu0 0.0
    %356 = vmatprep.subr.mxu0 0.0
    %357 = vmatpush1.msra.mxu0 0.0
    %358 = vmatprep.subr.mxu0 0.0
    %359 = vmatpush1.msra.mxu0 0.0
    %360 = vmatprep.subr.mxu0 0.0
    %361 = vmatpush1.msra.mxu0 0.0
    %362 = vmatprep.subr.mxu0 0.0
    %363 = vmatpush1.msra.mxu0 0.0
    %364 = vmatprep.subr.mxu0 0.0
    %365 = vmatpush1.msra.mxu0 0.0
    %366 = vmatprep.subr.mxu0 0.0
    %367 = vmatpush1.msra.mxu0 0.0
    %368 = vmatprep.subr.mxu0 0.0
    %369 = vmatpush1.msra.mxu0 0.0
    %370 = vmatprep.subr.mxu0 0.0
    %371 = vmatpush1.msra.mxu0 0.0
    %372 = vmatprep.subr.mxu0 0.0
    %373 = vmatpush1.msra.mxu0 0.0
    %374 = vmatprep.subr.mxu0 0.0
    %375 = vmatpush1.msra.mxu0 0.0
    %376 = vmatprep.mubr.f32.mxu0 0.0
    %377 = vmatmul.mubr.f32.gmra.mrb[0].mxu0 %v50
    %v378 = vpop.f32.mrb[0].mxu0
    %v379 = vadd.f32 %v41, %v378
    %v380 = vpop.f32.mrb[0].mxu0
    %381 = vmatprep.mubr.f32.mxu0 0.0
    %382 = vmatmul.mubr.f32.gmra.mrb[0].mxu0 %v53
    %v383 = vpop.f32.mrb[0].mxu0
    %v384 = vadd.f32 %v46, %v383
    %v385 = vpop.f32.mrb[0].mxu0
    %386 = vdwg.mxu0
    %v387 = vmax.f32 %v379, 0.0
    %v388 = vmax.f32 %v384, 0.0
    %s389 = scalar_lea.vmem [#allocation5], 48
    %390 = vst [vmem:[%s389] sm:$0xff] %v387
    %391 = vst [vmem:[%s389 + $0x8] sm:$0xff] %v388
    // Predicated region
    $region18: #{tpu_custom_call.1} parent=1 // pred_check
      _
    $region19: #{tpu_custom_call.1} parent=1 // pred_check_branch
      %393 = sbr.rel (0) target = $region21
    $region20: #{tpu_custom_call.1} parent=1 // pred_region
      %s395 = ssub.s32 1024, 1024
      %396 = vsyncadd [#allocation4], %s395
      %s397 = sshll.u32 [#allocation5], 4
      %s398 = int_to_ptr.vmem [resolvable:$true] %s397
      %403 = dma.vmem_to_hbm [thread:$0]  %s398, 1024, %s3, [#allocation4], 128, 128, 8
    $region21: #{tpu_custom_call.1} parent=1 // pred_fallthru
      _
    // Predicated region
    $region22: #{tpu_custom_call.1} parent=1 // pred_check
      _
    $region23: #{tpu_custom_call.1} parent=1 // pred_check_branch
      %405 = sbr.rel (0) target = $region25
    $region24: #{tpu_custom_call.1} parent=1 // pred_region
      %406 = dma.done [#allocation4], 1024
    $region25: #{tpu_custom_call.1} parent=1 // pred_fallthru
      _
    %407 = vsyncpa [#allocation3], 1
    %408 = vsyncpa [#allocation4], 1

</llo_original>
